<compile_context>
chip_gen: v6e
topology: v6e:2x2x1
jax: 0.10.0
libtpu: 0.0.40
codegen_flags: <defaults>
</compile_context>

<pallas_src>
import functools

import jax
import jax.numpy as jnp
from jax.experimental import pallas as pl
from jax.experimental.pallas import tpu as pltpu

LANE = 128  # TPU vreg lane width


def _round_up(x: int, m: int) -> int:
    return (x + m - 1) // m * m


def _mlp_kernel(x_ref, w1_ref, b1_ref, w2_ref, b2_ref, w3_ref, b3_ref, o_ref):
    """Fused 3-layer MLP forward on one (tile_b, obs_dim) batch tile."""
    x = x_ref[...]

    h1 = jnp.dot(x, w1_ref[...], preferred_element_type=jnp.float32) + b1_ref[...]
    h1 = jnp.maximum(h1, 0.0)  # ReLU (f32 VPU path, v5e-safe)

    h2 = jnp.dot(h1, w2_ref[...], preferred_element_type=jnp.float32) + b2_ref[...]
    h2 = jnp.maximum(h2, 0.0)  # ReLU

    out = jnp.dot(h2, w3_ref[...], preferred_element_type=jnp.float32) + b3_ref[...]
    # Store only the real output columns (out_dim lanes): the source slice stays
    # inside one (8,128) tile (no copy) and the HBM write is ~40x smaller than a
    # lane-padded (tb,128) store + wrapper slice pass.
    o_ref[...] = out[:, : o_ref.shape[-1]].astype(o_ref.dtype)


def pad_pursuer_params(params, dtype=jnp.float32):
    """Pad weights/biases to lane-dense (x128) shapes ONCE, outside the step loop.

    Padded rows/cols are zero, so real lanes are bit-identical (ReLU(0)=0).
    Pass dtype=jnp.bfloat16 (with bf16 obs) for the narrow v6e/v7x MXU path.
    """
    w1, b1, w2, b2, w3, b3 = params
    hidden = w1.shape[1]
    out_dim = w3.shape[1]
    hid_p = _round_up(hidden, LANE)
    out_p = _round_up(out_dim, LANE)
    f = lambda a: a.astype(dtype)
    w1_p = jnp.pad(f(w1), ((0, 0), (0, hid_p - hidden)))
    b1_p = jnp.pad(f(b1).reshape(1, -1), ((0, 0), (0, hid_p - hidden)))
    w2_p = jnp.pad(f(w2), ((0, hid_p - hidden), (0, hid_p - hidden)))
    b2_p = jnp.pad(f(b2).reshape(1, -1), ((0, 0), (0, hid_p - hidden)))
    w3_p = jnp.pad(f(w3), ((0, hid_p - hidden), (0, out_p - out_dim)))
    b3_p = jnp.pad(f(b3).reshape(1, -1), ((0, 0), (0, out_p - out_dim)))
    return (w1_p, b1_p, w2_p, b2_p, w3_p, b3_p)


@functools.partial(jax.jit, static_argnames=("out_dim", "batch_tile"))
def pursuer_policy_forward(obs, padded_params, *, out_dim=3, batch_tile=1024):
    """Pallas forward. obs: (B, obs_dim); padded_params from pad_pursuer_params()."""
    w1_p, b1_p, w2_p, b2_p, w3_p, b3_p = padded_params
    B, obs_dim = obs.shape
    hid_p = w1_p.shape[1]
    out_p = w3_p.shape[1]

    # Large tiles for HBM-roofline efficiency; cap at ceil(B/2) rounded to 8 so
    # mid-size batches still give >= 2 grid steps (both v7x TensorCores busy).
    tb = min(batch_tile, _round_up(pl.cdiv(B, 2), 8))
    grid = (pl.cdiv(B, tb),)  # ragged last block handled by Pallas (no jnp.pad)

    const = lambda i: (0, 0)  # weights: same block every step -> stay resident

    flops = 2 * B * (obs_dim * hid_p + hid_p * hid_p + hid_p * out_p)
    bytes_accessed = 4 * (B * obs_dim + B * out_dim) + 4 * (
        obs_dim * hid_p + hid_p + hid_p * hid_p + hid_p + hid_p * out_p + out_p
    )

    return pl.pallas_call(
        _mlp_kernel,
        out_shape=jax.ShapeDtypeStruct((B, out_dim), jnp.float32),
        grid=grid,
        in_specs=[
            pl.BlockSpec((tb, obs_dim), lambda i: (i, 0)),   # batch-tiled obs
            pl.BlockSpec((obs_dim, hid_p), const),           # W1
            pl.BlockSpec((1, hid_p), const),                 # b1
            pl.BlockSpec((hid_p, hid_p), const),             # W2
            pl.BlockSpec((1, hid_p), const),                 # b2
            pl.BlockSpec((hid_p, out_p), const),             # W3
            pl.BlockSpec((1, out_p), const),                 # b3
        ],
        out_specs=pl.BlockSpec((tb, out_dim), lambda i: (i, 0)),  # (tb, 3) store
        compiler_params=pltpu.CompilerParams(
            dimension_semantics=("parallel",),  # batch axis sharded across TCs
        ),
        cost_estimate=pl.CostEstimate(
            flops=flops, transcendentals=0, bytes_accessed=bytes_accessed
        ),
    )(obs, w1_p, b1_p, w2_p, b2_p, w3_p, b3_p)


def init_pursuer_policy_params(key, obs_dim, hidden_size=64, out_dim=3):
    """PyTorch nn.Linear-style init (U[-1/sqrt(fan_in), 1/sqrt(fan_in)]).

    Weights stored transposed relative to PyTorch: (in_features, out_features).
    """
    keys = jax.random.split(key, 6)

    def linear(kw, kb, fan_in, fan_out):
        bound = 1.0 / jnp.sqrt(float(fan_in))
        w = jax.random.uniform(kw, (fan_in, fan_out), jnp.float32, -bound, bound)
        b = jax.random.uniform(kb, (1, fan_out), jnp.float32, -bound, bound)
        return w, b

    w1, b1 = linear(keys[0], keys[1], obs_dim, hidden_size)
    w2, b2 = linear(keys[2], keys[3], hidden_size, hidden_size)
    w3, b3 = linear(keys[4], keys[5], hidden_size, out_dim)
    return (w1, b1, w2, b2, w3, b3)


def _reference_forward(obs, params):
    """Plain-JAX reference for correctness checking."""
    w1, b1, w2, b2, w3, b3 = params
    h1 = jnp.maximum(obs @ w1 + b1, 0.0)
    h2 = jnp.maximum(h1 @ w2 + b2, 0.0)
    return h2 @ w3 + b3


if __name__ == "__main__":
    B, OBS_DIM, HIDDEN, OUT = 8, 16, 64, 3

    key = jax.random.PRNGKey(0)
    k_obs, k_params, k_obs2 = jax.random.split(key, 3)

    params = init_pursuer_policy_params(k_params, OBS_DIM, HIDDEN, OUT)
    padded_params = pad_pursuer_params(params)  # padded ONCE, reused every call

    # Small-batch path (single grid step, tile rounded to 8 rows).
    obs = jax.random.normal(k_obs, (B, OBS_DIM), dtype=jnp.float32)
    out = jax.block_until_ready(pursuer_policy_forward(obs, padded_params, out_dim=OUT))
    ref = _reference_forward(obs, params)
    assert out.shape == (B, OUT), out.shape
    assert jnp.allclose(out, ref, atol=1e-5, rtol=1e-5), "mismatch vs reference (B=8)"

    # Multi-step grid + ragged last block (B not a multiple of the tile).
    B2 = 200
    obs2 = jax.random.normal(k_obs2, (B2, OBS_DIM), dtype=jnp.float32)
    out2 = jax.block_until_ready(pursuer_policy_forward(obs2, padded_params, out_dim=OUT))
    ref2 = _reference_forward(obs2, params)
    assert out2.shape == (B2, OUT), out2.shape
    assert jnp.allclose(out2, ref2, atol=1e-5, rtol=1e-5), "mismatch vs reference (B=200)"

    print("KERNEL_OK")
</pallas_src>

<mosaic_0001>
module attributes {stable_mosaic.version = 11 : i64} {
  func.func @_mlp_kernel(%arg0: i32, %arg1: memref<8x16xf32, #tpu.memory_space<vmem>>, %arg2: memref<16x128xf32, #tpu.memory_space<vmem>>, %arg3: memref<1x128xf32, #tpu.memory_space<vmem>>, %arg4: memref<128x128xf32, #tpu.memory_space<vmem>>, %arg5: memref<1x128xf32, #tpu.memory_space<vmem>>, %arg6: memref<128x128xf32, #tpu.memory_space<vmem>>, %arg7: memref<1x128xf32, #tpu.memory_space<vmem>>, %arg8: memref<8x3xf32, #tpu.memory_space<vmem>>) attributes {dimension_semantics = [#tpu.dimension_semantics<parallel>], iteration_bounds = array<i64: 1>, scalar_prefetch = 0 : i64, scratch_operands = 0 : i64, tpu.core_type = #tpu.core_type<tc>, window_params = [{transform_indices = @transform_0, window_bounds = array<i64: 8, 16>}, {pipeline_mode = #tpu.pipeline_mode<synchronous>, transform_indices = @transform_1, window_bounds = array<i64: 16, 128>}, {pipeline_mode = #tpu.pipeline_mode<synchronous>, transform_indices = @transform_2, window_bounds = array<i64: 1, 128>}, {pipeline_mode = #tpu.pipeline_mode<synchronous>, transform_indices = @transform_3, window_bounds = array<i64: 128, 128>}, {pipeline_mode = #tpu.pipeline_mode<synchronous>, transform_indices = @transform_4, window_bounds = array<i64: 1, 128>}, {pipeline_mode = #tpu.pipeline_mode<synchronous>, transform_indices = @transform_5, window_bounds = array<i64: 128, 128>}, {pipeline_mode = #tpu.pipeline_mode<synchronous>, transform_indices = @transform_6, window_bounds = array<i64: 1, 128>}, {transform_indices = @transform_7, window_bounds = array<i64: 8, 3>}]} {
    %c0 = arith.constant 0 : index
    %c0_0 = arith.constant 0 : index
    %0 = vector.load %arg1[%c0, %c0_0] : memref<8x16xf32, #tpu.memory_space<vmem>>, vector<8x16xf32>
    %c0_1 = arith.constant 0 : index
    %c0_2 = arith.constant 0 : index
    %1 = vector.load %arg2[%c0_1, %c0_2] : memref<16x128xf32, #tpu.memory_space<vmem>>, vector<16x128xf32>
    %cst = arith.constant dense<0.000000e+00> : vector<8x128xf32>
    %2 = tpu.matmul %0, %1, %cst {dimension_numbers = #tpu.dot_dimension_numbers<[1], [0], [0], [1], [0, 0, 1, 1], [], []>} : vector<8x16xf32>, vector<16x128xf32>, vector<8x128xf32> -> vector<8x128xf32>
    %c0_3 = arith.constant 0 : index
    %c0_4 = arith.constant 0 : index
    %3 = vector.load %arg3[%c0_3, %c0_4] : memref<1x128xf32, #tpu.memory_space<vmem>>, vector<1x128xf32>
    %4 = vector.broadcast %3 : vector<1x128xf32> to vector<8x128xf32>
    %5 = arith.addf %2, %4 : vector<8x128xf32>
    %cst_5 = arith.constant 0.000000e+00 : f32
    %6 = vector.broadcast %cst_5 : f32 to vector<8x128xf32>
    %7 = arith.maximumf %5, %6 : vector<8x128xf32>
    %c0_6 = arith.constant 0 : index
    %c0_7 = arith.constant 0 : index
    %8 = vector.load %arg4[%c0_6, %c0_7] : memref<128x128xf32, #tpu.memory_space<vmem>>, vector<128x128xf32>
    %cst_8 = arith.constant dense<0.000000e+00> : vector<8x128xf32>
    %9 = tpu.matmul %7, %8, %cst_8 {dimension_numbers = #tpu.dot_dimension_numbers<[1], [0], [0], [1], [0, 0, 1, 1], [], []>} : vector<8x128xf32>, vector<128x128xf32>, vector<8x128xf32> -> vector<8x128xf32>
    %c0_9 = arith.constant 0 : index
    %c0_10 = arith.constant 0 : index
    %10 = vector.load %arg5[%c0_9, %c0_10] : memref<1x128xf32, #tpu.memory_space<vmem>>, vector<1x128xf32>
    %11 = vector.broadcast %10 : vector<1x128xf32> to vector<8x128xf32>
    %12 = arith.addf %9, %11 : vector<8x128xf32>
    %cst_11 = arith.constant 0.000000e+00 : f32
    %13 = vector.broadcast %cst_11 : f32 to vector<8x128xf32>
    %14 = arith.maximumf %12, %13 : vector<8x128xf32>
    %c0_12 = arith.constant 0 : index
    %c0_13 = arith.constant 0 : index
    %15 = vector.load %arg6[%c0_12, %c0_13] : memref<128x128xf32, #tpu.memory_space<vmem>>, vector<128x128xf32>
    %cst_14 = arith.constant dense<0.000000e+00> : vector<8x128xf32>
    %16 = tpu.matmul %14, %15, %cst_14 {dimension_numbers = #tpu.dot_dimension_numbers<[1], [0], [0], [1], [0, 0, 1, 1], [], []>} : vector<8x128xf32>, vector<128x128xf32>, vector<8x128xf32> -> vector<8x128xf32>
    %c0_15 = arith.constant 0 : index
    %c0_16 = arith.constant 0 : index
    %17 = vector.load %arg7[%c0_15, %c0_16] : memref<1x128xf32, #tpu.memory_space<vmem>>, vector<1x128xf32>
    %18 = vector.broadcast %17 : vector<1x128xf32> to vector<8x128xf32>
    %19 = arith.addf %16, %18 : vector<8x128xf32>
    %20 = vector.extract_strided_slice %19 {offsets = [0, 0], sizes = [8, 3], strides = [1, 1]} : vector<8x128xf32> to vector<8x3xf32>
    %c0_17 = arith.constant 0 : index
    %c0_18 = arith.constant 0 : index
    %21 = vector.load %arg8[%c0_17, %c0_18] : memref<8x3xf32, #tpu.memory_space<vmem>>, vector<8x3xf32>
    tpu.vector_store %arg8[%c0_17, %c0_18], %20 {strides = array<i32>} : memref<8x3xf32, #tpu.memory_space<vmem>>, vector<8x3xf32>,
    return
  }
  func.func @transform_0(%arg0: i32) -> (i32, i32) {
    %c0_i32 = arith.constant 0 : i32
    %c0_i32_0 = arith.constant 0 : i32
    return %arg0, %c0_i32 : i32, i32
  }
  func.func @transform_1(%arg0: i32) -> (i32, i32) {
    %c0_i32 = arith.constant 0 : i32
    %c0_i32_0 = arith.constant 0 : i32
    %c0_i32_1 = arith.constant 0 : i32
    return %c0_i32, %c0_i32_0 : i32, i32
  }
  func.func @transform_2(%arg0: i32) -> (i32, i32) {
    %c0_i32 = arith.constant 0 : i32
    %c0_i32_0 = arith.constant 0 : i32
    %c0_i32_1 = arith.constant 0 : i32
    return %c0_i32, %c0_i32_0 : i32, i32
  }
  func.func @transform_3(%arg0: i32) -> (i32, i32) {
    %c0_i32 = arith.constant 0 : i32
    %c0_i32_0 = arith.constant 0 : i32
    %c0_i32_1 = arith.constant 0 : i32
    return %c0_i32, %c0_i32_0 : i32, i32
  }
  func.func @transform_4(%arg0: i32) -> (i32, i32) {
    %c0_i32 = arith.constant 0 : i32
    %c0_i32_0 = arith.constant 0 : i32
    %c0_i32_1 = arith.constant 0 : i32
    return %c0_i32, %c0_i32_0 : i32, i32
  }
  func.func @transform_5(%arg0: i32) -> (i32, i32) {
    %c0_i32 = arith.constant 0 : i32
    %c0_i32_0 = arith.constant 0 : i32
    %c0_i32_1 = arith.constant 0 : i32
    return %c0_i32, %c0_i32_0 : i32, i32
  }
  func.func @transform_6(%arg0: i32) -> (i32, i32) {
    %c0_i32 = arith.constant 0 : i32
    %c0_i32_0 = arith.constant 0 : i32
    %c0_i32_1 = arith.constant 0 : i32
    return %c0_i32, %c0_i32_0 : i32, i32
  }
  func.func @transform_7(%arg0: i32) -> (i32, i32) {
    %c0_i32 = arith.constant 0 : i32
    %c0_i32_0 = arith.constant 0 : i32
    return %arg0, %c0_i32 : i32, i32
  }
}

</mosaic_0001>

<llo_original>
// kernel: pursuer_policy_forward.1
$region0: #{pursuer_policy_forward.1}
  #allocation0 [shape = 'u32[]', space=smem, size = 0x4, offset = 0x4, fixed_abs, tag = 'smem constant byte address 0x4 - core index']
  #allocation1 [shape = 'u32[144,128]{1,0:T(1,128)}', space=vmem, size = 0x12000, scoped, tag = 'internal scratch']
  %s0 = inlined_call_operand.hbm [shape: f32[8,16], index: 0, kind: input, shape index: {}]
  %s1 = inlined_call_operand.hbm [shape: f32[16,128], index: 1, kind: input, shape index: {}]
  %s2 = inlined_call_operand.vmem [shape: f32[1,128], index: 2, kind: input, shape index: {}]
  %s3 = inlined_call_operand.hbm [shape: f32[128,128], index: 3, kind: input, shape index: {}]
  %s4 = inlined_call_operand.vmem [shape: f32[1,128], index: 4, kind: input, shape index: {}]
  %s5 = inlined_call_operand.hbm [shape: f32[128,128], index: 5, kind: input, shape index: {}]
  %s6 = inlined_call_operand.vmem [shape: f32[1,128], index: 6, kind: input, shape index: {}]
  %s7 = inlined_call_operand.vmem [shape: f32[8,3], index: 7, kind: output, shape index: {}]
  %s8 = sld [smem:[#allocation0]]
  $region54: #{pursuer_policy_forward.1} parent=0
    _
  %s10 = ssub.s32 1, %s8
  %s11 = scalar_select 0, %s10, %s8
  $region1: #{pursuer_policy_forward.1} parent=0
    #allocation2 [shape = 'u8[4096]{0}', space=vmem, size = 0x1000, scoped, tag = 'input window, operand 0, single buffered']
    #allocation3 [shape = 's32[1]{0}', space=sflag, size = 0x4, scoped, tag = 'scoped memory for pursuer_policy_forward.1']
    #allocation4 [shape = 'u8[8192]{0}', space=vmem, size = 0x2000, scoped, tag = 'input window, operand 1, single buffered']
    #allocation5 [shape = 's32[1]{0}', space=sflag, size = 0x4, scoped, tag = 'scoped memory for pursuer_policy_forward.1']
    #allocation6 [shape = 'u8[65536]{0}', space=vmem, size = 0x10000, scoped, tag = 'input window, operand 3, single buffered']
    #allocation7 [shape = 'u8[65536]{0}', space=vmem, size = 0x10000, scoped, tag = 'input window, operand 5, single buffered']
    #allocation8 [shape = 's32[1]{0}', space=sflag, size = 0x4, scoped, tag = 'scoped memory for pursuer_policy_forward.1']
    %12 = vsyncpa [#allocation3], 0
    %13 = vsyncpa [#allocation5], 0
    %14 = vsyncpa [#allocation8], 0
    // Predicated region
    $region2: #{pursuer_policy_forward.1} parent=1 // pred_check
      _
    $region3: #{pursuer_policy_forward.1} parent=1 // pred_check_branch
      %16 = sbr.rel (0) target = $region5
    $region4: #{pursuer_policy_forward.1} parent=1 // pred_region
      %s18 = ssub.s32 128, 128
      %19 = vsyncadd [#allocation3], %s18
      %s21 = sshll.u32 [#allocation2], 4
      %s22 = int_to_ptr.vmem [resolvable:$true] %s21
      %24 = dma.hbm_to_vmem [thread:$0]  %s0, 128, %s22, [#allocation3]
    $region5: #{pursuer_policy_forward.1} parent=1 // pred_fallthru
      _
    // Predicated region
    $region6: #{pursuer_policy_forward.1} parent=1 // pred_check
      _
    $region7: #{pursuer_policy_forward.1} parent=1 // pred_check_branch
      %26 = sbr.rel (0) target = $region9
    $region8: #{pursuer_policy_forward.1} parent=1 // pred_region
      %s28 = ssub.s32 256, 256
      %29 = vsyncadd [#allocation5], %s28
      %s30 = sshll.u32 [#allocation4], 4
      %s31 = int_to_ptr.vmem [resolvable:$true] %s30
      %36 = dma.hbm_to_vmem [thread:$0]  %s1, 256, %s31, [#allocation5], 128, 128, 8
    $region9: #{pursuer_policy_forward.1} parent=1 // pred_fallthru
      _
    // Predicated region
    $region10: #{pursuer_policy_forward.1} parent=1 // pred_check
      _
    $region11: #{pursuer_policy_forward.1} parent=1 // pred_check_branch
      %38 = sbr.rel (0) target = $region13
    $region12: #{pursuer_policy_forward.1} parent=1 // pred_region
      _
    $region13: #{pursuer_policy_forward.1} parent=1 // pred_fallthru
      _
    // Predicated region
    $region14: #{pursuer_policy_forward.1} parent=1 // pred_check
      _
    $region15: #{pursuer_policy_forward.1} parent=1 // pred_check_branch
      %40 = sbr.rel (0) target = $region17
    $region16: #{pursuer_policy_forward.1} parent=1 // pred_region
      %s42 = ssub.s32 2048, 2048
      %43 = vsyncadd [#allocation5], %s42
      %s44 = sshll.u32 [#allocation6], 4
      %s45 = int_to_ptr.vmem [resolvable:$true] %s44
      %50 = dma.hbm_to_vmem [thread:$0]  %s3, 2048, %s45, [#allocation5], 128, 128, 8
    $region17: #{pursuer_policy_forward.1} parent=1 // pred_fallthru
      _
    // Predicated region
    $region18: #{pursuer_policy_forward.1} parent=1 // pred_check
      _
    $region19: #{pursuer_policy_forward.1} parent=1 // pred_check_branch
      %52 = sbr.rel (0) target = $region21
    $region20: #{pursuer_policy_forward.1} parent=1 // pred_region
      _
    $region21: #{pursuer_policy_forward.1} parent=1 // pred_fallthru
      _
    // Predicated region
    $region22: #{pursuer_policy_forward.1} parent=1 // pred_check
      _
    $region23: #{pursuer_policy_forward.1} parent=1 // pred_check_branch
      %54 = sbr.rel (0) target = $region25
    $region24: #{pursuer_policy_forward.1} parent=1 // pred_region
      %s56 = ssub.s32 2048, 2048
      %57 = vsyncadd [#allocation8], %s56
      %s58 = sshll.u32 [#allocation7], 4
      %s59 = int_to_ptr.vmem [resolvable:$true] %s58
      %64 = dma.hbm_to_vmem [thread:$0]  %s5, 2048, %s59, [#allocation8], 128, 128, 8
    $region25: #{pursuer_policy_forward.1} parent=1 // pred_fallthru
      _
    // Predicated region
    $region26: #{pursuer_policy_forward.1} parent=1 // pred_check
      _
    $region27: #{pursuer_policy_forward.1} parent=1 // pred_check_branch
      %66 = sbr.rel (0) target = $region29
    $region28: #{pursuer_policy_forward.1} parent=1 // pred_region
      _
    $region29: #{pursuer_policy_forward.1} parent=1 // pred_fallthru
      _
    // Predicated region
    $region30: #{pursuer_policy_forward.1} parent=1 // pred_check
      _
    $region31: #{pursuer_policy_forward.1} parent=1 // pred_check_branch
      %68 = sbr.rel (0) target = $region33
    $region32: #{pursuer_policy_forward.1} parent=1 // pred_region
      %69 = dma.done [#allocation3], 128
    $region33: #{pursuer_policy_forward.1} parent=1 // pred_fallthru
      _
    // Predicated region
    $region34: #{pursuer_policy_forward.1} parent=1 // pred_check
      _
    $region35: #{pursuer_policy_forward.1} parent=1 // pred_check_branch
      %71 = sbr.rel (0) target = $region37
    $region36: #{pursuer_policy_forward.1} parent=1 // pred_region
      %72 = dma.done [#allocation5], 256
    $region37: #{pursuer_policy_forward.1} parent=1 // pred_fallthru
      _
    // Predicated region
    $region38: #{pursuer_policy_forward.1} parent=1 // pred_check
      _
    $region39: #{pursuer_policy_forward.1} parent=1 // pred_check_branch
      %74 = sbr.rel (0) target = $region41
    $region40: #{pursuer_policy_forward.1} parent=1 // pred_region
      %75 = dma.done [#allocation5], 2048
    $region41: #{pursuer_policy_forward.1} parent=1 // pred_fallthru
      _
    // Predicated region
    $region42: #{pursuer_policy_forward.1} parent=1 // pred_check
      _
    $region43: #{pursuer_policy_forward.1} parent=1 // pred_check_branch
      %77 = sbr.rel (0) target = $region45
    $region44: #{pursuer_policy_forward.1} parent=1 // pred_region
      %78 = dma.done [#allocation8], 2048
    $region45: #{pursuer_policy_forward.1} parent=1 // pred_fallthru
      _
    %v79 = vld [vmem:[#allocation2] sm:$0xff]
    %v80 = vld [vmem:[#allocation4] sm:$0xff]
    %v81 = vld [vmem:[#allocation4 + $0x8] sm:$0xff]
    %v82 = vld [vmem:[%s2] sm:$0x1]
    %v84 = vlaneseq
    %v85 = vshrl.u32 %v84, 7
    %v86 = vsub.s32 0, %v85
    %v87 = vrot.slane %v82, %v86
    %vm89 = vcmask 130048
    %v91 = vsel %vm89, %v79, 0
    %93 = vmatprep.subr.mxu0 0.0
    %94 = vmatpush1.msra.mxu0 0.0
    %95 = vmatprep.subr.mxu0 0.0
    %96 = vmatpush1.msra.mxu0 0.0
    %97 = vmatprep.subr.mxu0 0.0
    %98 = vmatpush1.msra.mxu0 0.0
    %99 = vmatprep.subr.mxu0 0.0
    %100 = vmatpush1.msra.mxu0 0.0
    %101 = vmatprep.subr.mxu0 0.0
    %102 = vmatpush1.msra.mxu0 0.0
    %103 = vmatprep.subr.mxu0 0.0
    %104 = vmatpush1.msra.mxu0 0.0
    %105 = vmatprep.subr.mxu0 0.0
    %106 = vmatpush1.msra.mxu0 0.0
    %107 = vmatprep.subr.mxu0 0.0
    %108 = vmatpush1.msra.mxu0 0.0
    %109 = vmatprep.subr.mxu0 0.0
    %110 = vmatpush1.msra.mxu0 0.0
    %111 = vmatprep.subr.mxu0 0.0
    %112 = vmatpush1.msra.mxu0 0.0
    %113 = vmatprep.subr.mxu0 0.0
    %114 = vmatpush1.msra.mxu0 0.0
    %115 = vmatprep.subr.mxu0 0.0
    %116 = vmatpush1.msra.mxu0 0.0
    %117 = vmatprep.subr.mxu0 0.0
    %118 = vmatpush1.msra.mxu0 0.0
    %119 = vmatprep.subr.mxu0 0.0
    %120 = vmatpush1.msra.mxu0 0.0
    %121 = vmatprep.subr.mxu0 0.0
    %122 = vmatpush1.msra.mxu0 %v81
    %123 = vmatprep.subr.mxu0 0.0
    %124 = vmatpush1.msra.mxu0 %v80
    %125 = vmatprep.subr.mxu0 0.0
    %126 = vmatpush2.msra.mxu0 0.0
    %127 = vmatprep.subr.mxu0 0.0
    %128 = vmatpush2.msra.mxu0 0.0
    %129 = vmatprep.subr.mxu0 0.0
    %130 = vmatpush2.msra.mxu0 0.0
    %131 = vmatprep.subr.mxu0 0.0
    %132 = vmatpush2.msra.mxu0 0.0
    %133 = vmatprep.subr.mxu0 0.0
    %134 = vmatpush2.msra.mxu0 0.0
    %135 = vmatprep.subr.mxu0 0.0
    %136 = vmatpush2.msra.mxu0 0.0
    %137 = vmatprep.subr.mxu0 0.0
    %138 = vmatpush2.msra.mxu0 0.0
    %139 = vmatprep.subr.mxu0 0.0
    %140 = vmatpush2.msra.mxu0 0.0
    %141 = vmatprep.subr.mxu0 0.0
    %142 = vmatpush2.msra.mxu0 0.0
    %143 = vmatprep.subr.mxu0 0.0
    %144 = vmatpush2.msra.mxu0 0.0
    %145 = vmatprep.subr.mxu0 0.0
    %146 = vmatpush2.msra.mxu0 0.0
    %147 = vmatprep.subr.mxu0 0.0
    %148 = vmatpush2.msra.mxu0 0.0
    %149 = vmatprep.subr.mxu0 0.0
    %150 = vmatpush2.msra.mxu0 0.0
    %151 = vmatprep.subr.mxu0 0.0
    %152 = vmatpush2.msra.mxu0 0.0
    %153 = vmatprep.subr.mxu0 0.0
    %154 = vmatpush2.msra.mxu0 0.0
    %155 = vmatprep.subr.mxu0 0.0
    %156 = vmatpush2.msra.mxu0 0.0
    %157 = vmatprep.mubr.f32.mxu0 0.0
    %158 = vmatmul.mubr.f32.gmra.mxu0 %v91
    %v159 = vpop.f32.mrf.mxu0
    %v160 = vadd.f32 %v87, %v159
    %v161 = vpop.f32.mrf.mxu0
    %162 = vdwg.mxu0
    %v163 = vmax.f32 %v160, 0.0
    %v164 = vld [vmem:[#allocation6] sm:$0xff]
    %v165 = vld [vmem:[#allocation6 + $0x8] sm:$0xff]
    %v166 = vld [vmem:[#allocation6 + $0x10] sm:$0xff]
    %v167 = vld [vmem:[#allocation6 + $0x18] sm:$0xff]
    %v168 = vld [vmem:[#allocation6 + $0x20] sm:$0xff]
    %v169 = vld [vmem:[#allocation6 + $0x28] sm:$0xff]
    %v170 = vld [vmem:[#allocation6 + $0x30] sm:$0xff]
    %v171 = vld [vmem:[#allocation6 + $0x38] sm:$0xff]
    %v172 = vld [vmem:[#allocation6 + $0x40] sm:$0xff]
    %v173 = vld [vmem:[#allocation6 + $0x48] sm:$0xff]
    %v174 = vld [vmem:[#allocation6 + $0x50] sm:$0xff]
    %v175 = vld [vmem:[#allocation6 + $0x58] sm:$0xff]
    %v176 = vld [vmem:[#allocation6 + $0x60] sm:$0xff]
    %v177 = vld [vmem:[#allocation6 + $0x68] sm:$0xff]
    %v178 = vld [vmem:[#allocation6 + $0x70] sm:$0xff]
    %v179 = vld [vmem:[#allocation6 + $0x78] sm:$0xff]
    %v180 = vld [vmem:[%s4] sm:$0x1]
    %v182 = vlaneseq
    %v183 = vshrl.u32 %v182, 7
    %v184 = vsub.s32 0, %v183
    %v185 = vrot.slane %v180, %v184
    %187 = vmatprep.subr.mxu0 0.0
    %188 = vmatpush1.msra.mxu0 %v179
    %189 = vmatprep.subr.mxu0 0.0
    %190 = vmatpush1.msra.mxu0 %v178
    %191 = vmatprep.subr.mxu0 0.0
    %192 = vmatpush1.msra.mxu0 %v177
    %193 = vmatprep.subr.mxu0 0.0
    %194 = vmatpush1.msra.mxu0 %v176
    %195 = vmatprep.subr.mxu0 0.0
    %196 = vmatpush1.msra.mxu0 %v175
    %197 = vmatprep.subr.mxu0 0.0
    %198 = vmatpush1.msra.mxu0 %v174
    %199 = vmatprep.subr.mxu0 0.0
    %200 = vmatpush1.msra.mxu0 %v173
    %201 = vmatprep.subr.mxu0 0.0
    %202 = vmatpush1.msra.mxu0 %v172
    %203 = vmatprep.subr.mxu0 0.0
    %204 = vmatpush1.msra.mxu0 %v171
    %205 = vmatprep.subr.mxu0 0.0
    %206 = vmatpush1.msra.mxu0 %v170
    %207 = vmatprep.subr.mxu0 0.0
    %208 = vmatpush1.msra.mxu0 %v169
    %209 = vmatprep.subr.mxu0 0.0
    %210 = vmatpush1.msra.mxu0 %v168
    %211 = vmatprep.subr.mxu0 0.0
    %212 = vmatpush1.msra.mxu0 %v167
    %213 = vmatprep.subr.mxu0 0.0
    %214 = vmatpush1.msra.mxu0 %v166
    %215 = vmatprep.subr.mxu0 0.0
    %216 = vmatpush1.msra.mxu0 %v165
    %217 = vmatprep.subr.mxu0 0.0
    %218 = vmatpush1.msra.mxu0 %v164
    %219 = vmatprep.subr.mxu0 0.0
    %220 = vmatpush2.msra.mxu0 0.0
    %221 = vmatprep.subr.mxu0 0.0
    %222 = vmatpush2.msra.mxu0 0.0
    %223 = vmatprep.subr.mxu0 0.0
    %224 = vmatpush2.msra.mxu0 0.0
    %225 = vmatprep.subr.mxu0 0.0
    %226 = vmatpush2.msra.mxu0 0.0
    %227 = vmatprep.subr.mxu0 0.0
    %228 = vmatpush2.msra.mxu0 0.0
    %229 = vmatprep.subr.mxu0 0.0
    %230 = vmatpush2.msra.mxu0 0.0
    %231 = vmatprep.subr.mxu0 0.0
    %232 = vmatpush2.msra.mxu0 0.0
    %233 = vmatprep.subr.mxu0 0.0
    %234 = vmatpush2.msra.mxu0 0.0
    %235 = vmatprep.subr.mxu0 0.0
    %236 = vmatpush2.msra.mxu0 0.0
    %237 = vmatprep.subr.mxu0 0.0
    %238 = vmatpush2.msra.mxu0 0.0
    %239 = vmatprep.subr.mxu0 0.0
    %240 = vmatpush2.msra.mxu0 0.0
    %241 = vmatprep.subr.mxu0 0.0
    %242 = vmatpush2.msra.mxu0 0.0
    %243 = vmatprep.subr.mxu0 0.0
    %244 = vmatpush2.msra.mxu0 0.0
    %245 = vmatprep.subr.mxu0 0.0
    %246 = vmatpush2.msra.mxu0 0.0
    %247 = vmatprep.subr.mxu0 0.0
    %248 = vmatpush2.msra.mxu0 0.0
    %249 = vmatprep.subr.mxu0 0.0
    %250 = vmatpush2.msra.mxu0 0.0
    %251 = vmatprep.mubr.f32.mxu0 0.0
    %252 = vmatmul.mubr.f32.gmra.mxu0 %v163
    %v253 = vpop.f32.mrf.mxu0
    %v254 = vadd.f32 %v185, %v253
    %v255 = vpop.f32.mrf.mxu0
    %256 = vdwg.mxu0
    %v257 = vmax.f32 %v254, 0.0
    %v258 = vld [vmem:[#allocation7] sm:$0xff]
    %v259 = vld [vmem:[#allocation7 + $0x8] sm:$0xff]
    %v260 = vld [vmem:[#allocation7 + $0x10] sm:$0xff]
    %v261 = vld [vmem:[#allocation7 + $0x18] sm:$0xff]
    %v262 = vld [vmem:[#allocation7 + $0x20] sm:$0xff]
    %v263 = vld [vmem:[#allocation7 + $0x28] sm:$0xff]
    %v264 = vld [vmem:[#allocation7 + $0x30] sm:$0xff]
    %v265 = vld [vmem:[#allocation7 + $0x38] sm:$0xff]
    %v266 = vld [vmem:[#allocation7 + $0x40] sm:$0xff]
    %v267 = vld [vmem:[#allocation7 + $0x48] sm:$0xff]
    %v268 = vld [vmem:[#allocation7 + $0x50] sm:$0xff]
    %v269 = vld [vmem:[#allocation7 + $0x58] sm:$0xff]
    %v270 = vld [vmem:[#allocation7 + $0x60] sm:$0xff]
    %v271 = vld [vmem:[#allocation7 + $0x68] sm:$0xff]
    %v272 = vld [vmem:[#allocation7 + $0x70] sm:$0xff]
    %v273 = vld [vmem:[#allocation7 + $0x78] sm:$0xff]
    %v274 = vld [vmem:[%s6] sm:$0x1]
    %v276 = vlaneseq
    %v277 = vshrl.u32 %v276, 7
    %v278 = vsub.s32 0, %v277
    %v279 = vrot.slane %v274, %v278
    %281 = vmatprep.subr.mxu0 0.0
    %282 = vmatpush1.msra.mxu0 %v273
    %283 = vmatprep.subr.mxu0 0.0
    %284 = vmatpush1.msra.mxu0 %v272
    %285 = vmatprep.subr.mxu0 0.0
    %286 = vmatpush1.msra.mxu0 %v271
    %287 = vmatprep.subr.mxu0 0.0
    %288 = vmatpush1.msra.mxu0 %v270
    %289 = vmatprep.subr.mxu0 0.0
    %290 = vmatpush1.msra.mxu0 %v269
    %291 = vmatprep.subr.mxu0 0.0
    %292 = vmatpush1.msra.mxu0 %v268
    %293 = vmatprep.subr.mxu0 0.0
    %294 = vmatpush1.msra.mxu0 %v267
    %295 = vmatprep.subr.mxu0 0.0
    %296 = vmatpush1.msra.mxu0 %v266
    %297 = vmatprep.subr.mxu0 0.0
    %298 = vmatpush1.msra.mxu0 %v265
    %299 = vmatprep.subr.mxu0 0.0
    %300 = vmatpush1.msra.mxu0 %v264
    %301 = vmatprep.subr.mxu0 0.0
    %302 = vmatpush1.msra.mxu0 %v263
    %303 = vmatprep.subr.mxu0 0.0
    %304 = vmatpush1.msra.mxu0 %v262
    %305 = vmatprep.subr.mxu0 0.0
    %306 = vmatpush1.msra.mxu0 %v261
    %307 = vmatprep.subr.mxu0 0.0
    %308 = vmatpush1.msra.mxu0 %v260
    %309 = vmatprep.subr.mxu0 0.0
    %310 = vmatpush1.msra.mxu0 %v259
    %311 = vmatprep.subr.mxu0 0.0
    %312 = vmatpush1.msra.mxu0 %v258
    %313 = vmatprep.subr.mxu0 0.0
    %314 = vmatpush2.msra.mxu0 0.0
    %315 = vmatprep.subr.mxu0 0.0
    %316 = vmatpush2.msra.mxu0 0.0
    %317 = vmatprep.subr.mxu0 0.0
    %318 = vmatpush2.msra.mxu0 0.0
    %319 = vmatprep.subr.mxu0 0.0
    %320 = vmatpush2.msra.mxu0 0.0
    %321 = vmatprep.subr.mxu0 0.0
    %322 = vmatpush2.msra.mxu0 0.0
    %323 = vmatprep.subr.mxu0 0.0
    %324 = vmatpush2.msra.mxu0 0.0
    %325 = vmatprep.subr.mxu0 0.0
    %326 = vmatpush2.msra.mxu0 0.0
    %327 = vmatprep.subr.mxu0 0.0
    %328 = vmatpush2.msra.mxu0 0.0
    %329 = vmatprep.subr.mxu0 0.0
    %330 = vmatpush2.msra.mxu0 0.0
    %331 = vmatprep.subr.mxu0 0.0
    %332 = vmatpush2.msra.mxu0 0.0
    %333 = vmatprep.subr.mxu0 0.0
    %334 = vmatpush2.msra.mxu0 0.0
    %335 = vmatprep.subr.mxu0 0.0
    %336 = vmatpush2.msra.mxu0 0.0
    %337 = vmatprep.subr.mxu0 0.0
    %338 = vmatpush2.msra.mxu0 0.0
    %339 = vmatprep.subr.mxu0 0.0
    %340 = vmatpush2.msra.mxu0 0.0
    %341 = vmatprep.subr.mxu0 0.0
    %342 = vmatpush2.msra.mxu0 0.0
    %343 = vmatprep.subr.mxu0 0.0
    %344 = vmatpush2.msra.mxu0 0.0
    %345 = vmatprep.mubr.f32.mxu0 0.0
    %346 = vmatmul.mubr.f32.gmra.mxu0 %v257
    %v347 = vpop.f32.mrf.mxu0
    %v348 = vadd.f32 %v279, %v347
    %v349 = vpop.f32.mrf.mxu0
    %350 = vdwg.mxu0
    %vm351 = vcmask 23552
    %352 = vst.msk [vmem:[%s7] sm:$0xff] %vm351, %v348
    // Predicated region
    $region46: #{pursuer_policy_forward.1} parent=1 // pred_check
      _
    $region47: #{pursuer_policy_forward.1} parent=1 // pred_check_branch
      %354 = sbr.rel (0) target = $region49
    $region48: #{pursuer_policy_forward.1} parent=1 // pred_region
      _
    $region49: #{pursuer_policy_forward.1} parent=1 // pred_fallthru
      _
    // Predicated region
    $region50: #{pursuer_policy_forward.1} parent=1 // pred_check
      _
    $region51: #{pursuer_policy_forward.1} parent=1 // pred_check_branch
      %356 = sbr.rel (0) target = $region53
    $region52: #{pursuer_policy_forward.1} parent=1 // pred_region
      _
    $region53: #{pursuer_policy_forward.1} parent=1 // pred_fallthru
      _
    %357 = vsyncpa [#allocation3], 1
    %358 = vsyncpa [#allocation5], 1
    %359 = vsyncpa [#allocation8], 1

</llo_original>
